<compile_context>
chip_gen: v7x
topology: tpu7x:2x2x1
jax: 0.10.0
libtpu: 0.0.40
codegen_flags: <defaults>
</compile_context>

<pallas_src>
import functools

import jax
import jax.numpy as jnp
from jax.experimental import pallas as pl
from jax.experimental.pallas import tpu as pltpu

# Hyper-parameters implied by the module's __init__ (chosen small, deterministic).
HIDDEN_LSTM = 16                 # hidden size of the LSTM in the parent model
IN_FEATURES = 16 * HIDDEN_LSTM   # 256  (already a multiple of 128 lanes)
NUM_POLARITIES = 3               # positive / neutral / negative

_LANE = 128                      # padded MXU operand width for W / bias
_TM = 4096                       # batch tile for the large-batch path
_SMALL_BATCH_MAX = _TM           # <= this: single-block no-grid path


def _linear_kernel(x_ref, w_ref, b_ref, o_ref):
    """y = (x @ w_pad + b_pad)[:, :n_out]  (one MXU pass, narrow lane-store)."""
    acc = jnp.dot(x_ref[...], w_ref[...],
                  preferred_element_type=jnp.float32)       # (rows, 128) on MXU
    y = acc + b_ref[...]                                     # VPU add, huge slack
    n_out = o_ref.shape[-1]                                  # static (== 3)
    o_ref[...] = y[:, :n_out].astype(o_ref.dtype)            # narrow masked store


def prep_classifier_params(weight, bias):
    """One-time parameter prep (hoisted out of the forward path).

    Args:
      weight: (NUM_POLARITIES, IN_FEATURES) float32  -- PyTorch layout.
      bias:   (NUM_POLARITIES,) float32.

    Returns:
      w_p: (IN_FEATURES, 128) float32   -- transposed + lane-padded weight.
      b_p: (1, 128) float32             -- lane-padded bias row.
    """
    n, d = weight.shape
    assert n <= _LANE, f"num_polarities={n} exceeds padded lane width {_LANE}"
    w_p = jnp.zeros((d, _LANE), dtype=jnp.float32)
    w_p = w_p.at[:, :n].set(weight.T.astype(jnp.float32))
    b_p = jnp.zeros((1, _LANE), dtype=jnp.float32)
    b_p = b_p.at[0, :n].set(bias.astype(jnp.float32))
    return w_p, b_p


def _cost_estimate(rows, d, n_out):
    return pl.CostEstimate(
        flops=2 * rows * d * _LANE,
        transcendentals=0,
        bytes_accessed=(rows * d + d * _LANE + _LANE + rows * n_out) * 4,
    )


def _forward_small(x, w_p, b_p, n_out):
    """Small-batch path: single block, no grid, no pipelining overhead."""
    B, D = x.shape
    return pl.pallas_call(
        _linear_kernel,
        out_shape=jax.ShapeDtypeStruct((B, n_out), jnp.float32),
        in_specs=[
            pl.BlockSpec(memory_space=pltpu.MemorySpace.VMEM),
            pl.BlockSpec(memory_space=pltpu.MemorySpace.VMEM),
            pl.BlockSpec(memory_space=pltpu.MemorySpace.VMEM),
        ],
        out_specs=pl.BlockSpec(memory_space=pltpu.MemorySpace.VMEM),
        cost_estimate=_cost_estimate(B, D, n_out),
    )(x, w_p, b_p)


def _forward_tiled(x, w_p, b_p, n_out):
    """Large-batch path: ragged grid over B (no pad / no slice); W & bias
    stay resident; batch axis parallel (2 TCs on v7x)."""
    B, D = x.shape
    grid = (pl.cdiv(B, _TM),)   # >= 2 because this path only runs for B > _TM
    return pl.pallas_call(
        _linear_kernel,
        out_shape=jax.ShapeDtypeStruct((B, n_out), jnp.float32),
        grid=grid,
        in_specs=[
            pl.BlockSpec((_TM, D), lambda i: (i, 0)),
            pl.BlockSpec((D, _LANE), lambda i: (0, 0)),
            pl.BlockSpec((1, _LANE), lambda i: (0, 0)),
        ],
        out_specs=pl.BlockSpec((_TM, n_out), lambda i: (i, 0)),
        compiler_params=pltpu.CompilerParams(
            dimension_semantics=("parallel",)),
        cost_estimate=_cost_estimate(B, D, n_out),
    )(x, w_p, b_p)


@functools.partial(jax.jit, static_argnames=("num_polarities",))
def sentiment_classifier_forward(representation, w_p, b_p,
                                 num_polarities=NUM_POLARITIES):
    """Pallas forward pass.

    Args:
      representation: (B, IN_FEATURES) float32.
      w_p: prepped weight (IN_FEATURES, 128) from prep_classifier_params.
      b_p: prepped bias (1, 128) from prep_classifier_params.

    Returns:
      (B, num_polarities) float32 unnormalized polarity scores.
    """
    x = representation.astype(jnp.float32)
    B = x.shape[0]
    if B <= _SMALL_BATCH_MAX:
        return _forward_small(x, w_p, b_p, num_polarities)
    return _forward_tiled(x, w_p, b_p, num_polarities)


def init_params(key):
    """Deterministic init matching the PyTorch module:
    weight ~ U(-0.1, 0.1), bias = 0."""
    weight = jax.random.uniform(
        key, (NUM_POLARITIES, IN_FEATURES), dtype=jnp.float32,
        minval=-0.1, maxval=0.1)
    bias = jnp.zeros((NUM_POLARITIES,), dtype=jnp.float32)
    return weight, bias


if __name__ == "__main__":
    key = jax.random.PRNGKey(0)
    k_w, k_x, k_x2 = jax.random.split(key, 3)

    weight, bias = init_params(k_w)
    # One-time parameter prep (hoisted out of the per-call forward path).
    w_p, b_p = prep_classifier_params(weight, bias)
    w_p, b_p = jax.block_until_ready((w_p, b_p))

    # --- Small-batch path (primary example) ---
    batch = 2
    representation = jax.random.normal(
        k_x, (batch, IN_FEATURES), dtype=jnp.float32)

    out = sentiment_classifier_forward(representation, w_p, b_p)
    out = jax.block_until_ready(out)

    ref = representation @ weight.T + bias
    assert out.shape == (batch, NUM_POLARITIES)
    assert jnp.allclose(out, ref, atol=1e-5, rtol=1e-5)

    # --- Ragged tiled path sanity check (grid = 2, masked final block) ---
    batch_big = _TM + 37
    rep_big = jax.random.normal(
        k_x2, (batch_big, IN_FEATURES), dtype=jnp.float32)
    out_big = jax.block_until_ready(
        sentiment_classifier_forward(rep_big, w_p, b_p))
    ref_big = rep_big @ weight.T + bias
    assert out_big.shape == (batch_big, NUM_POLARITIES)
    assert jnp.allclose(out_big, ref_big, atol=1e-4, rtol=1e-5)

    print("KERNEL_OK")
</pallas_src>

<mosaic_0001>
module attributes {stable_mosaic.version = 11 : i64} {
  func.func @_linear_kernel(%arg0: memref<2x256xf32, #tpu.memory_space<vmem>>, %arg1: memref<256x128xf32, #tpu.memory_space<vmem>>, %arg2: memref<1x128xf32, #tpu.memory_space<vmem>>, %arg3: memref<2x3xf32, #tpu.memory_space<vmem>>) attributes {dimension_semantics = [], scalar_prefetch = 0 : i64, scratch_operands = 0 : i64, tpu.core_type = #tpu.core_type<tc>} {
    %c0 = arith.constant 0 : index
    %c0_0 = arith.constant 0 : index
    %0 = vector.load %arg0[%c0, %c0_0] : memref<2x256xf32, #tpu.memory_space<vmem>>, vector<2x256xf32>
    %c0_1 = arith.constant 0 : index
    %c0_2 = arith.constant 0 : index
    %1 = vector.load %arg1[%c0_1, %c0_2] : memref<256x128xf32, #tpu.memory_space<vmem>>, vector<256x128xf32>
    %cst = arith.constant dense<0.000000e+00> : vector<2x128xf32>
    %2 = tpu.matmul %0, %1, %cst {dimension_numbers = #tpu.dot_dimension_numbers<[1], [0], [0], [1], [0, 0, 1, 1], [], []>} : vector<2x256xf32>, vector<256x128xf32>, vector<2x128xf32> -> vector<2x128xf32>
    %c0_3 = arith.constant 0 : index
    %c0_4 = arith.constant 0 : index
    %3 = vector.load %arg2[%c0_3, %c0_4] : memref<1x128xf32, #tpu.memory_space<vmem>>, vector<1x128xf32>
    %4 = vector.broadcast %3 : vector<1x128xf32> to vector<2x128xf32>
    %5 = arith.addf %2, %4 : vector<2x128xf32>
    %6 = vector.extract_strided_slice %5 {offsets = [0, 0], sizes = [2, 3], strides = [1, 1]} : vector<2x128xf32> to vector<2x3xf32>
    %c0_5 = arith.constant 0 : index
    %c0_6 = arith.constant 0 : index
    %7 = vector.load %arg3[%c0_5, %c0_6] : memref<2x3xf32, #tpu.memory_space<vmem>>, vector<2x3xf32>
    tpu.vector_store %arg3[%c0_5, %c0_6], %6 {strides = array<i32>} : memref<2x3xf32, #tpu.memory_space<vmem>>, vector<2x3xf32>,
    return
  }
}

</mosaic_0001>

<llo_original>
// kernel: sentiment_classifier_forward.1
$region0: #{sentiment_classifier_forward.1}
  #allocation0 [shape = 'u32[]', space=smem, size = 0x4, offset = 0x4, fixed_abs, tag = 'smem constant byte address 0x4 - core index']
  #allocation1 [shape = 'u32[144,128]{1,0:T(1,128)}', space=vmem, size = 0x12000, scoped, tag = 'internal scratch']
  %s0 = inlined_call_operand.hbm [shape: f32[2,256], index: 0, kind: input, shape index: {}]
  %s1 = inlined_call_operand.hbm [shape: f32[256,128], index: 1, kind: input, shape index: {}]
  %s2 = inlined_call_operand.vmem [shape: f32[1,128], index: 2, kind: input, shape index: {}]
  %s3 = inlined_call_operand.hbm [shape: f32[2,3], index: 3, kind: output, shape index: {}]
  %s4 = sld [smem:[#allocation0]]
  $region30: #{sentiment_classifier_forward.1} parent=0
    _
  %s6 = ssub.s32 1, %s4
  %s7 = scalar_select 0, %s6, %s4
  $region1: #{sentiment_classifier_forward.1} parent=0
    #allocation2 [shape = 'u8[2048]{0}', space=vmem, size = 0x800, scoped, tag = 'input window, operand 0, single buffered']
    #allocation3 [shape = 's32[1]{0}', space=sflag, size = 0x4, scoped, tag = 'scoped memory for sentiment_classifier_forward.1']
    #allocation4 [shape = 's32[1]{0}', space=sflag, size = 0x4, scoped, tag = 'scoped memory for sentiment_classifier_forward.1']
    #allocation5 [shape = 'u8[131072]{0}', space=vmem, size = 0x20000, scoped, tag = 'input window, operand 1, single buffered']
    #allocation6 [shape = 's32[1]{0}', space=sflag, size = 0x4, scoped, tag = 'scoped memory for sentiment_classifier_forward.1']
    #allocation7 [shape = 'u8[1024]{0}', space=vmem, size = 0x400, scoped, tag = 'output window, operand 0, single buffered']
    %8 = vsyncpa [#allocation3], 0
    %9 = vsyncpa [#allocation6], 0
    %10 = vsyncpa [#allocation4], 0
    // Predicated region
    $region2: #{sentiment_classifier_forward.1} parent=1 // pred_check
      _
    $region3: #{sentiment_classifier_forward.1} parent=1 // pred_check_branch
      %12 = sbr.rel (0) target = $region5
    $region4: #{sentiment_classifier_forward.1} parent=1 // pred_region
      %s14 = ssub.s32 64, 64
      %15 = vsyncadd [#allocation3], %s14
      %s17 = sshll.u32 [#allocation2], 4
      %s18 = int_to_ptr.vmem [resolvable:$true] %s17
      %20 = dma.hbm_to_vmem [thread:$0]  %s0, 64, %s18, [#allocation3]
    $region5: #{sentiment_classifier_forward.1} parent=1 // pred_fallthru
      _
    // Predicated region
    $region6: #{sentiment_classifier_forward.1} parent=1 // pred_check
      _
    $region7: #{sentiment_classifier_forward.1} parent=1 // pred_check_branch
      %22 = sbr.rel (0) target = $region9
    $region8: #{sentiment_classifier_forward.1} parent=1 // pred_region
      %s24 = ssub.s32 4096, 4096
      %25 = vsyncadd [#allocation6], %s24
      %s26 = sshll.u32 [#allocation5], 4
      %s27 = int_to_ptr.vmem [resolvable:$true] %s26
      %32 = dma.hbm_to_vmem [thread:$0]  %s1, 4096, %s27, [#allocation6], 128, 128, 8
    $region9: #{sentiment_classifier_forward.1} parent=1 // pred_fallthru
      _
    // Predicated region
    $region10: #{sentiment_classifier_forward.1} parent=1 // pred_check
      _
    $region11: #{sentiment_classifier_forward.1} parent=1 // pred_check_branch
      %34 = sbr.rel (0) target = $region13
    $region12: #{sentiment_classifier_forward.1} parent=1 // pred_region
      _
    $region13: #{sentiment_classifier_forward.1} parent=1 // pred_fallthru
      _
    // Predicated region
    $region14: #{sentiment_classifier_forward.1} parent=1 // pred_check
      _
    $region15: #{sentiment_classifier_forward.1} parent=1 // pred_check_branch
      %36 = sbr.rel (0) target = $region17
    $region16: #{sentiment_classifier_forward.1} parent=1 // pred_region
      %37 = dma.done [#allocation3], 64
    $region17: #{sentiment_classifier_forward.1} parent=1 // pred_fallthru
      _
    // Predicated region
    $region18: #{sentiment_classifier_forward.1} parent=1 // pred_check
      _
    $region19: #{sentiment_classifier_forward.1} parent=1 // pred_check_branch
      %39 = sbr.rel (0) target = $region21
    $region20: #{sentiment_classifier_forward.1} parent=1 // pred_region
      %40 = dma.done [#allocation6], 4096
    $region21: #{sentiment_classifier_forward.1} parent=1 // pred_fallthru
      _
    %v41 = vld [vmem:[#allocation2] sm:$0xf]
    %v42 = vld [vmem:[#allocation5] sm:$0xff]
    %v43 = vld [vmem:[#allocation5 + $0x8] sm:$0xff]
    %v44 = vld [vmem:[#allocation5 + $0x10] sm:$0xff]
    %v45 = vld [vmem:[#allocation5 + $0x18] sm:$0xff]
    %v46 = vld [vmem:[#allocation5 + $0x20] sm:$0xff]
    %v47 = vld [vmem:[#allocation5 + $0x28] sm:$0xff]
    %v48 = vld [vmem:[#allocation5 + $0x30] sm:$0xff]
    %v49 = vld [vmem:[#allocation5 + $0x38] sm:$0xff]
    %v50 = vld [vmem:[#allocation5 + $0x40] sm:$0xff]
    %v51 = vld [vmem:[#allocation5 + $0x48] sm:$0xff]
    %v52 = vld [vmem:[#allocation5 + $0x50] sm:$0xff]
    %v53 = vld [vmem:[#allocation5 + $0x58] sm:$0xff]
    %v54 = vld [vmem:[#allocation5 + $0x60] sm:$0xff]
    %v55 = vld [vmem:[#allocation5 + $0x68] sm:$0xff]
    %v56 = vld [vmem:[#allocation5 + $0x70] sm:$0xff]
    %v57 = vld [vmem:[#allocation5 + $0x78] sm:$0xff]
    %v58 = vld [vmem:[#allocation5 + $0x80] sm:$0xff]
    %v59 = vld [vmem:[#allocation5 + $0x88] sm:$0xff]
    %v60 = vld [vmem:[#allocation5 + $0x90] sm:$0xff]
    %v61 = vld [vmem:[#allocation5 + $0x98] sm:$0xff]
    %v62 = vld [vmem:[#allocation5 + $0xa0] sm:$0xff]
    %v63 = vld [vmem:[#allocation5 + $0xa8] sm:$0xff]
    %v64 = vld [vmem:[#allocation5 + $0xb0] sm:$0xff]
    %v65 = vld [vmem:[#allocation5 + $0xb8] sm:$0xff]
    %v66 = vld [vmem:[#allocation5 + $0xc0] sm:$0xff]
    %v67 = vld [vmem:[#allocation5 + $0xc8] sm:$0xff]
    %v68 = vld [vmem:[#allocation5 + $0xd0] sm:$0xff]
    %v69 = vld [vmem:[#allocation5 + $0xd8] sm:$0xff]
    %v70 = vld [vmem:[#allocation5 + $0xe0] sm:$0xff]
    %v71 = vld [vmem:[#allocation5 + $0xe8] sm:$0xff]
    %v72 = vld [vmem:[#allocation5 + $0xf0] sm:$0xff]
    %v73 = vld [vmem:[#allocation5 + $0xf8] sm:$0xff]
    %v74 = vld [vmem:[%s2] sm:$0x1]
    %v76 = vlaneseq
    %v77 = vshrl.u32 %v76, 7
    %v78 = vsub.s32 0, %v77
    %v79 = vrot.slane %v74, %v78
    %v83 = vunpack.c.l.s4 1983009808
    %v84 = vunpack.c.0.s8 %v83
    %v85 = vlaneseq
    %v86 = vshrl.u32 %v85, 7
    %v87 = vsub.s32 %v84, %v86
    %v88 = vrot.slane %v41, %v87
    %v89 = vcombine.high %v88, %v88
    %92 = vmatprep.subr.mxu0 0.0
    %93 = vmatpush1.msra.mxu0 %v42
    %94 = vmatprep.subr.mxu0 0.0
    %95 = vmatpush1.msra.mxu0 %v43
    %96 = vmatprep.subr.mxu0 0.0
    %97 = vmatpush1.msra.mxu0 %v44
    %98 = vmatprep.subr.mxu0 0.0
    %99 = vmatpush1.msra.mxu0 %v45
    %100 = vmatprep.subr.mxu0 0.0
    %101 = vmatpush1.msra.mxu0 %v46
    %102 = vmatprep.subr.mxu0 0.0
    %103 = vmatpush1.msra.mxu0 %v47
    %104 = vmatprep.subr.mxu0 0.0
    %105 = vmatpush1.msra.mxu0 %v48
    %106 = vmatprep.subr.mxu0 0.0
    %107 = vmatpush1.msra.mxu0 %v49
    %108 = vmatprep.subr.mxu0 0.0
    %109 = vmatpush1.msra.mxu0 %v50
    %110 = vmatprep.subr.mxu0 0.0
    %111 = vmatpush1.msra.mxu0 %v51
    %112 = vmatprep.subr.mxu0 0.0
    %113 = vmatpush1.msra.mxu0 %v52
    %114 = vmatprep.subr.mxu0 0.0
    %115 = vmatpush1.msra.mxu0 %v53
    %116 = vmatprep.subr.mxu0 0.0
    %117 = vmatpush1.msra.mxu0 %v54
    %118 = vmatprep.subr.mxu0 0.0
    %119 = vmatpush1.msra.mxu0 %v55
    %120 = vmatprep.subr.mxu0 0.0
    %121 = vmatpush1.msra.mxu0 %v56
    %122 = vmatprep.subr.mxu0 0.0
    %123 = vmatpush1.msra.mxu0 %v57
    %124 = vmatprep.subr.mxu0 0.0
    %125 = vmatpush1.msra.mxu0 %v58
    %126 = vmatprep.subr.mxu0 0.0
    %127 = vmatpush1.msra.mxu0 %v59
    %128 = vmatprep.subr.mxu0 0.0
    %129 = vmatpush1.msra.mxu0 %v60
    %130 = vmatprep.subr.mxu0 0.0
    %131 = vmatpush1.msra.mxu0 %v61
    %132 = vmatprep.subr.mxu0 0.0
    %133 = vmatpush1.msra.mxu0 %v62
    %134 = vmatprep.subr.mxu0 0.0
    %135 = vmatpush1.msra.mxu0 %v63
    %136 = vmatprep.subr.mxu0 0.0
    %137 = vmatpush1.msra.mxu0 %v64
    %138 = vmatprep.subr.mxu0 0.0
    %139 = vmatpush1.msra.mxu0 %v65
    %140 = vmatprep.subr.mxu0 0.0
    %141 = vmatpush1.msra.mxu0 %v66
    %142 = vmatprep.subr.mxu0 0.0
    %143 = vmatpush1.msra.mxu0 %v67
    %144 = vmatprep.subr.mxu0 0.0
    %145 = vmatpush1.msra.mxu0 %v68
    %146 = vmatprep.subr.mxu0 0.0
    %147 = vmatpush1.msra.mxu0 %v69
    %148 = vmatprep.subr.mxu0 0.0
    %149 = vmatpush1.msra.mxu0 %v70
    %150 = vmatprep.subr.mxu0 0.0
    %151 = vmatpush1.msra.mxu0 %v71
    %152 = vmatprep.subr.mxu0 0.0
    %153 = vmatpush1.msra.mxu0 %v72
    %154 = vmatprep.subr.mxu0 0.0
    %155 = vmatpush1.msra.mxu0 %v73
    %156 = vmatprep.mubr.f32.mxu0 %v89
    %157 = vmatmul.mubr.f32.gmra.mrb[0].mxu0 %v88
    %v158 = vpop.f32.mrb[0].mxu0
    %v159 = vadd.f32 %v79, %v158
    %v160 = vpop.f32.mrb[0].mxu0
    %161 = vdwg.mxu0
    %vm162 = vcmask 17408
    %163 = vst.msk [vmem:[#allocation7] sm:$0x3] %vm162, %v159
    // Predicated region
    $region22: #{sentiment_classifier_forward.1} parent=1 // pred_check
      _
    $region23: #{sentiment_classifier_forward.1} parent=1 // pred_check_branch
      %165 = sbr.rel (0) target = $region25
    $region24: #{sentiment_classifier_forward.1} parent=1 // pred_region
      %s167 = ssub.s32 32, 32
      %168 = vsyncadd [#allocation4], %s167
      %s170 = sshll.u32 [#allocation7], 4
      %s171 = int_to_ptr.vmem [resolvable:$true] %s170
      %173 = dma.vmem_to_hbm [thread:$0]  %s171, 32, %s3, [#allocation4]
    $region25: #{sentiment_classifier_forward.1} parent=1 // pred_fallthru
      _
    // Predicated region
    $region26: #{sentiment_classifier_forward.1} parent=1 // pred_check
      _
    $region27: #{sentiment_classifier_forward.1} parent=1 // pred_check_branch
      %175 = sbr.rel (0) target = $region29
    $region28: #{sentiment_classifier_forward.1} parent=1 // pred_region
      %176 = dma.done [#allocation4], 32
    $region29: #{sentiment_classifier_forward.1} parent=1 // pred_fallthru
      _
    %177 = vsyncpa [#allocation3], 1
    %178 = vsyncpa [#allocation6], 1
    %179 = vsyncpa [#allocation4], 1

</llo_original>
